<compile_context>
chip_gen: v5e
topology: v5e:2x2
jax: 0.10.0
libtpu: 0.0.40
codegen_flags: <defaults>
</compile_context>

<pallas_src>
import functools

import jax
import jax.numpy as jnp
from jax.experimental import pallas as pl
from jax.experimental.pallas import tpu as pltpu

_EPS = 1e-8
_LANES = 128
_SUBLANES = 8


def _mbstd_tiled_kernel(x_ref, o_ref, *, inv_g):
    """One K-tile of the group-std reduction.

    x_ref: (G, MF, TKS, 128) input tile (native dtype).
    o_ref: (MF, 8, 128) f32 accumulator of per-position std partial sums;
           revisited across the K grid axis (zeroed on the first step).
    """
    kk = pl.program_id(0)

    @pl.when(kk == 0)
    def _():
        o_ref[...] = jnp.zeros_like(o_ref)

    x = x_ref[...].astype(jnp.float32)                       # upcast in-register
    g, mf, tks, lanes = x.shape
    # Group mean / biased variance: leading-axis reductions are G elementwise
    # VPU adds (no cross-lane / cross-sublane work in the hot loop).
    mean_g = jnp.sum(x, axis=0, keepdims=True) * inv_g       # (1, MF, TKS, 128)
    var = jnp.sum((x - mean_g) ** 2, axis=0) * inv_g         # (MF, TKS, 128)
    std = jnp.sqrt(var + _EPS)
    # Fold TKS down to 8 sublanes: the reshape is vreg-tile aligned (TKS % 8
    # == 0), so this stays pure elementwise vreg adds — still no XLU.
    std = std.reshape(mf, tks // _SUBLANES, _SUBLANES, lanes).sum(axis=1)
    o_ref[...] += std                                        # (MF, 8, 128)


def _mbstd_small_kernel(x_ref, o_ref, *, inv_g, inv_k):
    """Fallback: whole problem in one VMEM block (K not a multiple of 1024)."""
    x = x_ref[...].astype(jnp.float32)                       # (G, MF, K)
    mean_g = jnp.sum(x, axis=0, keepdims=True) * inv_g
    var = jnp.sum((x - mean_g) ** 2, axis=0) * inv_g         # (MF, K)
    std = jnp.sqrt(var + _EPS)
    o_ref[...] = (jnp.sum(std, axis=1) * inv_k)[:, None]     # (MF, 1)


def _pick_tks(ks_total, g, mf, itemsize):
    """Largest sublane-tile count (multiple of 8, dividing KS) under a VMEM budget."""
    budget = 24 * 1024 * 1024          # conservative: fits v5e/v6e/v7x scoped VMEM
    per_tks = 2 * g * mf * _LANES * itemsize   # double-buffered input bytes / sublane
    max_tks = max(_SUBLANES, budget // per_tks)
    if ks_total <= max_tks:
        return ks_total
    best = _SUBLANES
    t = _SUBLANES
    top = min(ks_total, max_tks)
    while t <= top:
        if ks_total % t == 0:
            best = t
        t += _SUBLANES
    return best


def minibatch_stddev(x, group_size=4, num_new_features=1, k_tile_sublanes=None):
    """JAX/Pallas equivalent of MinibatchStdDev.forward.  x: (B, C, H, W)."""
    b, c, h, w = x.shape
    g = min(group_size, b)
    f = num_new_features
    assert b % g == 0, f"batch {b} must be divisible by group size {g}"
    assert c % f == 0, f"channels {c} must be divisible by num_new_features {f}"
    m = b // g
    cpf = c // f
    mf = m * f
    k_total = cpf * h * w
    inv_g = 1.0 / g
    inv_k = 1.0 / k_total
    itemsize = jnp.dtype(x.dtype).itemsize

    if k_total % (_SUBLANES * _LANES) == 0:
        # Primary path: copy-free (G, MF, KS, 128) view; tile KS.
        ks_total = k_total // _LANES
        tks = k_tile_sublanes or _pick_tks(ks_total, g, mf, itemsize)
        assert tks % _SUBLANES == 0 and ks_total % tks == 0
        n_k = ks_total // tks
        xr = x.reshape(g, mf, ks_total, _LANES)
        partial = pl.pallas_call(
            functools.partial(_mbstd_tiled_kernel, inv_g=inv_g),
            out_shape=jax.ShapeDtypeStruct((mf, _SUBLANES, _LANES), jnp.float32),
            grid=(n_k,),
            in_specs=[pl.BlockSpec((g, mf, tks, _LANES), lambda kk: (0, 0, kk, 0))],
            out_specs=pl.BlockSpec((mf, _SUBLANES, _LANES), lambda kk: (0, 0, 0)),
            compiler_params=pltpu.CompilerParams(
                dimension_semantics=("arbitrary",),
                vmem_limit_bytes=32 * 1024 * 1024,
            ),
        )(xr)
        # Tiny (MF, 8, 128) -> (MF,) mean; fuses with the broadcast glue below.
        std = jnp.sum(partial, axis=(1, 2)) * inv_k
    else:
        # TODO(synk): odd K (not a multiple of 1024) falls back to a single
        # full-array block; fine for the small/irregular shapes that hit it.
        xr = x.reshape(g, mf, k_total)
        std = pl.pallas_call(
            functools.partial(_mbstd_small_kernel, inv_g=inv_g, inv_k=inv_k),
            out_shape=jax.ShapeDtypeStruct((mf, 1), jnp.float32),
            grid=(1,),
            in_specs=[pl.BlockSpec((g, mf, k_total), lambda kk: (0, 0, 0))],
            out_specs=pl.BlockSpec((mf, 1), lambda kk: (0, 0)),
            compiler_params=pltpu.CompilerParams(
                dimension_semantics=("arbitrary",),
                vmem_limit_bytes=32 * 1024 * 1024,
            ),
        )(xr).reshape(mf)

    # Layout glue (XLA): broadcast the per-(m, f) scalar to (B, F, H, W), concat.
    y = std.reshape(1, m, f, 1, 1)
    y = jnp.broadcast_to(y, (g, m, f, h, w)).reshape(b, f, h, w).astype(x.dtype)
    return jnp.concatenate([x, y], axis=1)


def _reference(x, group_size=4, num_new_features=1):
    # Pure-JAX reference mirroring the PyTorch forward, for sanity checking.
    b, c, h, w = x.shape
    g = min(group_size, b)
    f = num_new_features
    y = x.reshape(g, -1, f, c // f, h, w)
    y = y - jnp.mean(y, axis=0, keepdims=True)
    y = jnp.mean(y ** 2, axis=0, keepdims=True)
    y = jnp.sqrt(y + 1e-8)
    y = jnp.mean(y, axis=(3, 4, 5), keepdims=True)[:, :, :, 0]   # (1, M, F, 1, 1)
    y = jnp.broadcast_to(y, (g,) + y.shape[1:3] + (h, w)).reshape(b, f, h, w)
    return jnp.concatenate([x, y], axis=1)


if __name__ == "__main__":
    key = jax.random.PRNGKey(0)

    # Primary case: B=2, C=4, H=W=16 (K = 1024, MF = 1).
    x = jax.random.normal(key, (2, 4, 16, 16), dtype=jnp.float32)
    out = jax.block_until_ready(minibatch_stddev(x, 4, 1))
    ref = _reference(x, 4, 1)
    assert out.shape == (2, 5, 16, 16), out.shape
    assert jnp.allclose(out, ref, atol=1e-5, rtol=1e-5), "mismatch (case 1)"

    # Multi-step K grid (exercises the revisited-output accumulator).
    x2 = jax.random.normal(jax.random.PRNGKey(1), (2, 4, 32, 32), dtype=jnp.float32)
    out2 = jax.block_until_ready(minibatch_stddev(x2, 4, 1, k_tile_sublanes=8))
    ref2 = _reference(x2, 4, 1)
    assert jnp.allclose(out2, ref2, atol=1e-5, rtol=1e-5), "mismatch (case 2)"

    # MF > 1 (real group split + multiple new stddev features).
    x3 = jax.random.normal(jax.random.PRNGKey(2), (8, 8, 16, 16), dtype=jnp.float32)
    out3 = jax.block_until_ready(minibatch_stddev(x3, 4, 2))
    ref3 = _reference(x3, 4, 2)
    assert jnp.allclose(out3, ref3, atol=1e-5, rtol=1e-5), "mismatch (case 3)"

    print("KERNEL_OK")
</pallas_src>

<mosaic_0001>
module attributes {stable_mosaic.version = 11 : i64} {
  func.func @_mbstd_tiled_kernel(%arg0: i32, %arg1: memref<2x1x8x128xf32, #tpu.memory_space<vmem>>, %arg2: memref<1x8x128xf32, #tpu.memory_space<vmem>>) attributes {dimension_semantics = [#tpu.dimension_semantics<arbitrary>], iteration_bounds = array<i64: 1>, scalar_prefetch = 0 : i64, scratch_operands = 0 : i64, tpu.core_type = #tpu.core_type<tc>, window_params = [{transform_indices = @transform_0, window_bounds = array<i64: 2, 1, 8, 128>}, {pipeline_mode = #tpu.pipeline_mode<synchronous>, transform_indices = @transform_1, window_bounds = array<i64: 1, 8, 128>}]} {
    %c0_i32 = arith.constant 0 : i32
    %0 = arith.cmpi eq, %arg0, %c0_i32 : i32
    %1 = arith.extui %0 : i1 to i32
    %c0_i32_0 = arith.constant 0 : i32
    %2 = arith.cmpi ne, %1, %c0_i32_0 : i32
    scf.if %2 {
      %cst_15 = arith.constant 0.000000e+00 : f32
      %22 = vector.broadcast %cst_15 : f32 to vector<1x8x128xf32>
      %c0_16 = arith.constant 0 : index
      %c0_17 = arith.constant 0 : index
      %c0_18 = arith.constant 0 : index
      %23 = vector.load %arg2[%c0_16, %c0_17, %c0_18] : memref<1x8x128xf32, #tpu.memory_space<vmem>>, vector<1x8x128xf32>
      tpu.vector_store %arg2[%c0_16, %c0_17, %c0_18], %22 {strides = array<i32>} : memref<1x8x128xf32, #tpu.memory_space<vmem>>, vector<1x8x128xf32>,
    } else {
    }
    %c0 = arith.constant 0 : index
    %c0_1 = arith.constant 0 : index
    %c0_2 = arith.constant 0 : index
    %c0_3 = arith.constant 0 : index
    %3 = vector.load %arg1[%c0, %c0_1, %c0_2, %c0_3] : memref<2x1x8x128xf32, #tpu.memory_space<vmem>>, vector<2x1x8x128xf32>
    %cst = arith.constant dense<0.000000e+00> : vector<1x8x128xf32>
    %4 = vector.multi_reduction <add>, %3, %cst [0] : vector<2x1x8x128xf32> to vector<1x8x128xf32>
    %5 = vector.shape_cast %4 : vector<1x8x128xf32> to vector<1x1x8x128xf32>
    %cst_4 = arith.constant 5.000000e-01 : f32
    %6 = vector.broadcast %cst_4 : f32 to vector<1x1x8x128xf32>
    %7 = arith.mulf %5, %6 : vector<1x1x8x128xf32>
    %8 = vector.broadcast %7 : vector<1x1x8x128xf32> to vector<2x1x8x128xf32>
    %9 = arith.subf %3, %8 : vector<2x1x8x128xf32>
    %10 = arith.mulf %9, %9 : vector<2x1x8x128xf32>
    %cst_5 = arith.constant dense<0.000000e+00> : vector<1x8x128xf32>
    %11 = vector.multi_reduction <add>, %10, %cst_5 [0] : vector<2x1x8x128xf32> to vector<1x8x128xf32>
    %cst_6 = arith.constant 5.000000e-01 : f32
    %12 = vector.broadcast %cst_6 : f32 to vector<1x8x128xf32>
    %13 = arith.mulf %11, %12 : vector<1x8x128xf32>
    %cst_7 = arith.constant 9.99999993E-9 : f32
    %14 = vector.broadcast %cst_7 : f32 to vector<1x8x128xf32>
    %15 = arith.addf %13, %14 : vector<1x8x128xf32>
    %16 = math.sqrt %15 : vector<1x8x128xf32>
    %17 = vector.shape_cast %16 : vector<1x8x128xf32> to vector<1x1x8x128xf32>
    %cst_8 = arith.constant dense<0.000000e+00> : vector<1x8x128xf32>
    %18 = vector.multi_reduction <add>, %17, %cst_8 [1] : vector<1x1x8x128xf32> to vector<1x8x128xf32>
    %c0_9 = arith.constant 0 : index
    %c0_10 = arith.constant 0 : index
    %c0_11 = arith.constant 0 : index
    %19 = vector.load %arg2[%c0_9, %c0_10, %c0_11] : memref<1x8x128xf32, #tpu.memory_space<vmem>>, vector<1x8x128xf32>
    %20 = arith.addf %19, %18 : vector<1x8x128xf32>
    %c0_12 = arith.constant 0 : index
    %c0_13 = arith.constant 0 : index
    %c0_14 = arith.constant 0 : index
    %21 = vector.load %arg2[%c0_12, %c0_13, %c0_14] : memref<1x8x128xf32, #tpu.memory_space<vmem>>, vector<1x8x128xf32>
    tpu.vector_store %arg2[%c0_12, %c0_13, %c0_14], %20 {strides = array<i32>} : memref<1x8x128xf32, #tpu.memory_space<vmem>>, vector<1x8x128xf32>,
    return
  }
  func.func @transform_0(%arg0: i32) -> (i32, i32, i32, i32) {
    %c0_i32 = arith.constant 0 : i32
    %c0_i32_0 = arith.constant 0 : i32
    %c0_i32_1 = arith.constant 0 : i32
    %c0_i32_2 = arith.constant 0 : i32
    return %c0_i32, %c0_i32_0, %arg0, %c0_i32_1 : i32, i32, i32, i32
  }
  func.func @transform_1(%arg0: i32) -> (i32, i32, i32) {
    %c0_i32 = arith.constant 0 : i32
    %c0_i32_0 = arith.constant 0 : i32
    %c0_i32_1 = arith.constant 0 : i32
    %c0_i32_2 = arith.constant 0 : i32
    return %c0_i32, %c0_i32_0, %c0_i32_1 : i32, i32, i32
  }
}

</mosaic_0001>

<llo_original>
// kernel: tpu_custom_call.1
$region0: #{tpu_custom_call.1}
  #allocation0 [shape = 'u32[]', space=smem, size = 0x4, offset = 0x4, fixed_abs, tag = 'smem constant byte address 0x4 - core index']
  #allocation1 [shape = 'u32[72,128]{1,0:T(1,128)}', space=vmem, size = 0x9000, scoped, tag = 'internal scratch']
  %s0 = inlined_call_operand.hbm [shape: f32[2,1,8,128], index: 0, kind: input, shape index: {}]
  %s1 = inlined_call_operand.hbm [shape: f32[1,8,128], index: 1, kind: output, shape index: {}]
  %s2 = sld [smem:[#allocation0]]
  $region22: #{tpu_custom_call.1} parent=0
    _
  %s4 = ssub.s32 1, %s2
  %s5 = scalar_select 0, %s4, %s2
  $region1: #{tpu_custom_call.1} parent=0
    #allocation2 [shape = 'u8[8192]{0}', space=vmem, size = 0x2000, scoped, tag = 'input window, operand 0, single buffered']
    #allocation3 [shape = 's32[1]{0}', space=sflag, size = 0x4, scoped, tag = 'scoped memory for tpu_custom_call.1']
    #allocation4 [shape = 's32[1]{0}', space=sflag, size = 0x4, scoped, tag = 'scoped memory for tpu_custom_call.1']
    #allocation5 [shape = 'u8[4096]{0}', space=vmem, size = 0x1000, scoped, tag = 'output window, operand 0, single buffered']
    %6 = vsyncpa [#allocation3], 0
    %7 = vsyncpa [#allocation4], 0
    // Predicated region
    $region2: #{tpu_custom_call.1} parent=1 // pred_check
      _
    $region3: #{tpu_custom_call.1} parent=1 // pred_check_branch
      %9 = sbr.rel (0) target = $region5
    $region4: #{tpu_custom_call.1} parent=1 // pred_region
      %11 = vsyncadd [#allocation3], 0
      %s12 = sshll.u32 %s0, 4
      %s13 = int_to_ptr.hbm [resolvable:$true] %s12
      %s14 = sshll.u32 [#allocation2], 4
      %s15 = int_to_ptr.vmem [resolvable:$true] %s14
      %20 = dma.hbm_to_vmem [thread:$0]  %s13, 256, %s15, [#allocation3], 128, 128, 8
    $region5: #{tpu_custom_call.1} parent=1 // pred_fallthru
      _
    // Predicated region
    $region6: #{tpu_custom_call.1} parent=1 // pred_check
      _
    $region7: #{tpu_custom_call.1} parent=1 // pred_check_branch
      %22 = sbr.rel (0) target = $region9
    $region8: #{tpu_custom_call.1} parent=1 // pred_region
      %24 = dma.done [#allocation3], 256
    $region9: #{tpu_custom_call.1} parent=1 // pred_fallthru
      _
    %p25 = scmp.eq.s32.totalorder 0, 0
    // Predicated region
    $region10: #{tpu_custom_call.1} parent=1 // pred_check
      %p26 = pneg %p25
    $region11: #{tpu_custom_call.1} parent=1 // pred_check_branch
      %28 = sbr.rel (%p26) target = $region13
    $region12: #{tpu_custom_call.1} parent=1 // pred_region
      %29 = vst [vmem:[#allocation5] sm:$0xff] 0.0
    $region13: #{tpu_custom_call.1} parent=1 // pred_fallthru
      _
    %v30 = vld [vmem:[#allocation2] sm:$0xff]
    %v31 = vld [vmem:[#allocation2 + $0x8] sm:$0xff]
    %v32 = vadd.f32 %v30, %v31
    %v33 = vmul.f32 %v32, 0.5
    %v34 = vsub.f32 %v30, %v33
    %v35 = vsub.f32 %v31, %v33
    %v36 = vmul.f32 %v34, %v34
    %v37 = vmul.f32 %v35, %v35
    %v38 = vadd.f32 %v36, %v37
    %v39 = vmul.f32 %v38, 0.5
    %v40 = vadd.f32 %v39, 1e-08
    %v41 = vrsqrt.pop %v40
    %v42 = vmul.f32 %v41, %v40
    %v43 = vmul.f32 %v42, %v41
    %v44 = vmul.f32 0.5, %v43
    %v45 = vsub.f32 1.5, %v44
    %v46 = vmul.f32 %v41, %v45
    %v47 = vmul.f32 %v40, %v46
    %vm48 = vcmp.eq.f32.partialorder %v40, inf
    %v49 = vsel %vm48, %v40, %v47
    %vm50 = vcmp.eq.f32.partialorder %v40, 0.0
    %v51 = vand.u32 %v40, 2147483648
    %v52 = vsel %vm50, %v51, %v49
    %v53 = vadd.f32 %v52, 0.0
    %v54 = vld [vmem:[#allocation5] sm:$0xff]
    %v55 = vadd.f32 %v54, %v53
    %56 = vst [vmem:[#allocation5] sm:$0xff] %v55
    // Predicated region
    $region14: #{tpu_custom_call.1} parent=1 // pred_check
      _
    $region15: #{tpu_custom_call.1} parent=1 // pred_check_branch
      %58 = sbr.rel (0) target = $region17
    $region16: #{tpu_custom_call.1} parent=1 // pred_region
      %60 = vsyncadd [#allocation4], 0
      %s62 = sshll.u32 [#allocation5], 4
      %s63 = int_to_ptr.vmem [resolvable:$true] %s62
      %s64 = sshll.u32 %s1, 4
      %s65 = int_to_ptr.hbm [resolvable:$true] %s64
      %67 = dma.vmem_to_hbm [thread:$0]  %s63, 128, %s65, [#allocation4]
    $region17: #{tpu_custom_call.1} parent=1 // pred_fallthru
      _
    // Predicated region
    $region18: #{tpu_custom_call.1} parent=1 // pred_check
      _
    $region19: #{tpu_custom_call.1} parent=1 // pred_check_branch
      %69 = sbr.rel (0) target = $region21
    $region20: #{tpu_custom_call.1} parent=1 // pred_region
      %71 = dma.done [#allocation4], 128
    $region21: #{tpu_custom_call.1} parent=1 // pred_fallthru
      _
    %72 = vsyncpa [#allocation3], 1
    %73 = vsyncpa [#allocation4], 1

</llo_original>
